<compile_context>
chip_gen: v6e
topology: v6e:2x2x1
jax: 0.10.0
libtpu: 0.0.40
codegen_flags: <defaults>
</compile_context>

<pallas_src>
import math
from functools import partial

import jax
import jax.numpy as jnp
from jax.experimental import pallas as pl
from jax.experimental.pallas import tpu as pltpu


def _vmem_limit_bytes():
    """3/4 of physical VMEM (per core), with a safe fallback."""
    try:
        cap = int(getattr(pltpu.get_tpu_info(), "vmem_capacity_bytes", 64 * 1024 * 1024))
    except Exception:
        cap = 64 * 1024 * 1024
    return min(112 * 1024 * 1024, max(32 * 1024 * 1024, (cap * 3) // 4))


def _conv_im2col_kernel(x_ref, w_ref, b_ref, o_ref, *, kh, kw, sh, sw, tr, wo, cin, cout_p):
    # x_ref: (1, sh*sw, H_ph, W_ph, Cin)  full phase-decomposed input of this batch element
    # w_ref: (KH*KW*Cin, Cout_p)          im2col weight matrix (tap-major, cin-minor rows)
    # b_ref: (1, Cout_p) f32
    # o_ref: (1, TR, Wo, Cout_p)
    r = pl.program_id(1)
    row0 = pl.multiple_of(r * tr, tr)

    slabs = {}          # (row_phase, col_phase, dh) -> (TR, W_ph, Cin) load, reused across taps
    pieces = []
    for ikh in range(kh):
        rph, dh = ikh % sh, ikh // sh
        for ikw in range(kw):
            cph, dw = ikw % sw, ikw // sw
            key = (rph, cph, dh)
            if key not in slabs:
                slabs[key] = x_ref[0, rph * sw + cph, pl.ds(row0 + dh, tr), :, :]
            pieces.append(slabs[key][:, dw:dw + wo, :])          # (TR, Wo, Cin)

    im2col = jnp.concatenate(pieces, axis=-1) if len(pieces) > 1 else pieces[0]
    im2col = im2col.reshape(tr * wo, kh * kw * cin)              # (TR*Wo, KH*KW*Cin), bf16

    acc = jnp.dot(im2col, w_ref[...], preferred_element_type=jnp.float32)   # f32 accumulate
    acc = acc + b_ref[...]                                       # (TR*Wo, Cout_p) + (1, Cout_p)
    o_ref[...] = acc.reshape(1, tr, wo, cout_p).astype(o_ref.dtype)


def conv2d_static_same_padding(x_nchw, weight, bias=None, stride=(1, 1), *,
                               compute_dtype=jnp.bfloat16):
    """Matches Conv2dStaticSamePadding.forward (groups=1, dilation=1).

    x_nchw: (N, Cin, H, W)          -- PyTorch NCHW input
    weight: (Cout, Cin, KH, KW)     -- PyTorch Conv2d weight layout
    bias:   (Cout,) or None
    returns (N, Cout, Ho, Wo), Ho = ceil(H/sh), Wo = ceil(W/sw)
    """
    n, cin, h, w = x_nchw.shape
    cout, cin_w, kh, kw = weight.shape
    assert cin_w == cin  # TODO(synk): groups > 1 (grouped / depthwise conv) not implemented
    if isinstance(stride, int):
        stride = (stride, stride)
    sh, sw = int(stride[0]), int(stride[1])

    ho = -(-h // sh)
    wo = -(-w // sw)
    extra_v = (ho - 1) * sh - h + kh
    extra_h = (wo - 1) * sw - w + kw
    top, left = extra_v // 2, extra_h // 2
    bottom, right = extra_v - top, extra_h - left

    dh_max = (kh - 1) // sh
    dw_max = (kw - 1) // sw
    h_ph, w_ph = ho + dh_max, wo + dw_max
    p_ph = sh * sw
    cout_p = max(128, -(-cout // 128) * 128)
    k_total = kh * kw * cin

    # ---- wrapper-side layout plumbing (one pass over the input) ----------------------
    x = jnp.transpose(x_nchw, (0, 2, 3, 1)).astype(compute_dtype)          # NCHW -> NHWC, bf16

    # F.pad semantics (negative pads crop), plus bottom/right zero fill so every stride
    # phase has the identical (H_ph, W_ph) extent. The fill rows/cols are never read.
    ct, cb = max(0, -top), max(0, -bottom)
    cl, cr = max(0, -left), max(0, -right)
    x = x[:, ct:h - cb, cl:w - cr, :]
    cur_h = x.shape[1] + max(0, top) + max(0, bottom)
    cur_w = x.shape[2] + max(0, left) + max(0, right)
    x = jnp.pad(x, ((0, 0),
                    (max(0, top), max(0, bottom) + (h_ph * sh - cur_h)),
                    (max(0, left), max(0, right) + (w_ph * sw - cur_w)),
                    (0, 0)))

    # Stride-phase decomposition: (N, H_ph*sh, W_ph*sw, Cin) -> (N, sh*sw, H_ph, W_ph, Cin)
    x = x.reshape(n, h_ph, sh, w_ph, sw, cin)
    x = jnp.transpose(x, (0, 2, 4, 1, 3, 5)).reshape(n, p_ph, h_ph, w_ph, cin)

    # im2col weight matrix, tap-major / cin-minor rows, Cout padded to a lane-dense width.
    w_mat = jnp.transpose(weight, (2, 3, 1, 0)).reshape(k_total, cout)
    w_mat = jnp.pad(w_mat, ((0, 0), (0, cout_p - cout))).astype(compute_dtype)
    if bias is None:
        b_vec = jnp.zeros((1, cout_p), jnp.float32)
    else:
        b_vec = jnp.pad(bias.astype(jnp.float32), (0, cout_p - cout)).reshape(1, cout_p)

    # ---- tile selection (VMEM-budgeted, generation-aware) ----------------------------
    out_dtype = x_nchw.dtype
    out_isz = jnp.dtype(out_dtype).itemsize
    c_isz = jnp.dtype(compute_dtype).itemsize
    vmem_limit = _vmem_limit_bytes()
    cin_l = max(128, -(-cin // 128) * 128)          # lane-padded channel width in VMEM
    resident = (2 * p_ph * h_ph * w_ph * cin_l * c_isz     # phase block (double-buffered)
                + k_total * cout_p * c_isz + cout_p * 4)   # weights + bias (resident)
    per_row = wo * (2 * cout_p * out_isz                   # output tile (double-buffered)
                    + kh * kw * cin_l * c_isz              # im2col slab
                    + 2 * cout_p * 4)                      # f32 accumulator + slack
    tile_budget = max(per_row, vmem_limit // 2 - resident)
    row_cap = max(1, min(ho, tile_budget // per_row, -(-512 // wo)))
    tr = next(d for d in range(int(row_cap), 0, -1) if ho % d == 0)

    kernel = partial(_conv_im2col_kernel, kh=kh, kw=kw, sh=sh, sw=sw,
                     tr=tr, wo=wo, cin=cin, cout_p=cout_p)

    cost = pl.CostEstimate(
        flops=int(2 * n * ho * wo * k_total * cout),
        transcendentals=0,
        bytes_accessed=int(n * p_ph * h_ph * w_ph * cin * c_isz
                           + k_total * cout_p * c_isz + cout_p * 4
                           + n * ho * wo * cout_p * out_isz))

    out_padded = pl.pallas_call(
        kernel,
        out_shape=jax.ShapeDtypeStruct((n, ho, wo, cout_p), out_dtype),
        grid_spec=pltpu.PrefetchScalarGridSpec(
            num_scalar_prefetch=0,
            grid=(n, ho // tr),
            in_specs=[
                # Full phase block per batch element: block index constant over the row
                # axis -> fetched once per batch element, kept resident.
                pl.BlockSpec((1, p_ph, h_ph, w_ph, cin), lambda b, r: (b, 0, 0, 0, 0)),
                # Weights / bias: constant block index -> DMA'd once.
                pl.BlockSpec((k_total, cout_p), lambda b, r: (0, 0)),
                pl.BlockSpec((1, cout_p), lambda b, r: (0, 0)),
            ],
            out_specs=pl.BlockSpec((1, tr, wo, cout_p), lambda b, r: (b, r, 0, 0)),
        ),
        compiler_params=pltpu.CompilerParams(
            dimension_semantics=("parallel", "parallel"),
            vmem_limit_bytes=int(vmem_limit)),
        cost_estimate=cost,
    )(x, w_mat, b_vec)

    out = out_padded[..., :cout]                     # drop lane padding
    return jnp.transpose(out, (0, 3, 1, 2))          # NHWC -> NCHW


if __name__ == "__main__":
    key = jax.random.PRNGKey(0)
    k_x, k_w, k_b = jax.random.split(key, 3)

    # Conv2dStaticSamePadding(in_channels=4, out_channels=8, kernel_size=3, stride=2, bias=True)
    N, CIN, H, W = 2, 4, 16, 16
    COUT, K = 8, 3
    STRIDE = (2, 2)

    x = jax.random.normal(k_x, (N, CIN, H, W), jnp.float32)
    weight = jax.random.normal(k_w, (COUT, CIN, K, K), jnp.float32) * 0.1
    bias = jax.random.normal(k_b, (COUT,), jnp.float32) * 0.1

    out = conv2d_static_same_padding(x, weight, bias, stride=STRIDE)
    out = jax.block_until_ready(out)

    # References: XLA conv with identical static-same padding.
    extra_w = (math.ceil(W / STRIDE[1]) - 1) * STRIDE[1] - W + K
    extra_h = (math.ceil(H / STRIDE[0]) - 1) * STRIDE[0] - H + K
    left = extra_w // 2
    right = extra_w - left
    top = extra_h // 2
    bottom = extra_h - top

    def ref_conv(xx, ww):
        return jax.lax.conv_general_dilated(
            xx, ww, window_strides=STRIDE,
            padding=((top, bottom), (left, right)),
            dimension_numbers=("NCHW", "OIHW", "NCHW"),
            precision=jax.lax.Precision.HIGHEST,
        ) + bias.reshape(1, COUT, 1, 1)

    ref_f32 = ref_conv(x, weight)                                            # pure f32
    ref_bf16 = ref_conv(x.astype(jnp.bfloat16).astype(jnp.float32),          # bf16 inputs,
                        weight.astype(jnp.bfloat16).astype(jnp.float32))     # f32 accumulate

    assert out.shape == ref_f32.shape == (N, COUT, math.ceil(H / STRIDE[0]),
                                          math.ceil(W / STRIDE[1]))
    # Exact (up to summation order) vs. the bf16-input / f32-accumulate reference.
    assert jnp.allclose(out, ref_bf16, atol=1e-4, rtol=1e-4), \
        float(jnp.max(jnp.abs(out - ref_bf16)))
    # Sanity vs. the full-f32 torch-equivalent semantics (bf16 MXU tolerance).
    assert jnp.allclose(out, ref_f32, atol=1e-1, rtol=1e-1)
    print("KERNEL_OK")
</pallas_src>

<mosaic_0001>
module attributes {stable_mosaic.version = 11 : i64} {
  func.func @_conv_im2col_kernel(%arg0: i32, %arg1: i32, %arg2: memref<1x4x9x9x4xbf16, #tpu.memory_space<vmem>>, %arg3: memref<36x128xbf16, #tpu.memory_space<vmem>>, %arg4: memref<1x128xf32, #tpu.memory_space<vmem>>, %arg5: memref<1x8x8x128xf32, #tpu.memory_space<vmem>>) attributes {dimension_semantics = [#tpu.dimension_semantics<parallel>, #tpu.dimension_semantics<parallel>], iteration_bounds = array<i64: 2, 1>, scalar_prefetch = 0 : i64, scratch_operands = 0 : i64, tpu.core_type = #tpu.core_type<tc>, window_params = [{transform_indices = @transform_0, window_bounds = array<i64: 1, 4, 9, 9, 4>}, {pipeline_mode = #tpu.pipeline_mode<synchronous>, transform_indices = @transform_1, window_bounds = array<i64: 36, 128>}, {pipeline_mode = #tpu.pipeline_mode<synchronous>, transform_indices = @transform_2, window_bounds = array<i64: 1, 128>}, {transform_indices = @transform_3, window_bounds = array<i64: 1, 8, 8, 128>}]} {
    %c8_i32 = arith.constant 8 : i32
    %0 = arith.muli %arg1, %c8_i32 : i32
    %1 = tpu.assume_multiple %0, 8 : i32
    %c0_i32 = arith.constant 0 : i32
    %2 = arith.addi %1, %c0_i32 : i32
    %c0 = arith.constant 0 : index
    %c0_0 = arith.constant 0 : index
    %3 = arith.index_cast %2 : i32 to index
    %c0_1 = arith.constant 0 : index
    %c0_2 = arith.constant 0 : index
    %4 = vector.load %arg2[%c0, %c0_0, %3, %c0_1, %c0_2] : memref<1x4x9x9x4xbf16, #tpu.memory_space<vmem>>, vector<1x1x8x9x4xbf16>
    %5 = vector.shape_cast %4 : vector<1x1x8x9x4xbf16> to vector<8x9x4xbf16>
    %6 = vector.extract_strided_slice %5 {offsets = [0, 0, 0], sizes = [8, 8, 4], strides = [1, 1, 1]} : vector<8x9x4xbf16> to vector<8x8x4xbf16>
    %c0_i32_3 = arith.constant 0 : i32
    %7 = arith.addi %1, %c0_i32_3 : i32
    %c0_4 = arith.constant 0 : index
    %c1 = arith.constant 1 : index
    %8 = arith.index_cast %7 : i32 to index
    %c0_5 = arith.constant 0 : index
    %c0_6 = arith.constant 0 : index
    %9 = vector.load %arg2[%c0_4, %c1, %8, %c0_5, %c0_6] : memref<1x4x9x9x4xbf16, #tpu.memory_space<vmem>>, vector<1x1x8x9x4xbf16>
    %10 = vector.shape_cast %9 : vector<1x1x8x9x4xbf16> to vector<8x9x4xbf16>
    %11 = vector.extract_strided_slice %10 {offsets = [0, 0, 0], sizes = [8, 8, 4], strides = [1, 1, 1]} : vector<8x9x4xbf16> to vector<8x8x4xbf16>
    %12 = vector.extract_strided_slice %5 {offsets = [0, 1, 0], sizes = [8, 8, 4], strides = [1, 1, 1]} : vector<8x9x4xbf16> to vector<8x8x4xbf16>
    %c0_i32_7 = arith.constant 0 : i32
    %13 = arith.addi %1, %c0_i32_7 : i32
    %c0_8 = arith.constant 0 : index
    %c2 = arith.constant 2 : index
    %14 = arith.index_cast %13 : i32 to index
    %c0_9 = arith.constant 0 : index
    %c0_10 = arith.constant 0 : index
    %15 = vector.load %arg2[%c0_8, %c2, %14, %c0_9, %c0_10] : memref<1x4x9x9x4xbf16, #tpu.memory_space<vmem>>, vector<1x1x8x9x4xbf16>
    %16 = vector.shape_cast %15 : vector<1x1x8x9x4xbf16> to vector<8x9x4xbf16>
    %17 = vector.extract_strided_slice %16 {offsets = [0, 0, 0], sizes = [8, 8, 4], strides = [1, 1, 1]} : vector<8x9x4xbf16> to vector<8x8x4xbf16>
    %c0_i32_11 = arith.constant 0 : i32
    %18 = arith.addi %1, %c0_i32_11 : i32
    %c0_12 = arith.constant 0 : index
    %c3 = arith.constant 3 : index
    %19 = arith.index_cast %18 : i32 to index
    %c0_13 = arith.constant 0 : index
    %c0_14 = arith.constant 0 : index
    %20 = vector.load %arg2[%c0_12, %c3, %19, %c0_13, %c0_14] : memref<1x4x9x9x4xbf16, #tpu.memory_space<vmem>>, vector<1x1x8x9x4xbf16>
    %21 = vector.shape_cast %20 : vector<1x1x8x9x4xbf16> to vector<8x9x4xbf16>
    %22 = vector.extract_strided_slice %21 {offsets = [0, 0, 0], sizes = [8, 8, 4], strides = [1, 1, 1]} : vector<8x9x4xbf16> to vector<8x8x4xbf16>
    %23 = vector.extract_strided_slice %16 {offsets = [0, 1, 0], sizes = [8, 8, 4], strides = [1, 1, 1]} : vector<8x9x4xbf16> to vector<8x8x4xbf16>
    %c1_i32 = arith.constant 1 : i32
    %24 = arith.addi %1, %c1_i32 : i32
    %c0_15 = arith.constant 0 : index
    %c0_16 = arith.constant 0 : index
    %25 = arith.index_cast %24 : i32 to index
    %c0_17 = arith.constant 0 : index
    %c0_18 = arith.constant 0 : index
    %26 = vector.load %arg2[%c0_15, %c0_16, %25, %c0_17, %c0_18] : memref<1x4x9x9x4xbf16, #tpu.memory_space<vmem>>, vector<1x1x8x9x4xbf16>
    %27 = vector.shape_cast %26 : vector<1x1x8x9x4xbf16> to vector<8x9x4xbf16>
    %28 = vector.extract_strided_slice %27 {offsets = [0, 0, 0], sizes = [8, 8, 4], strides = [1, 1, 1]} : vector<8x9x4xbf16> to vector<8x8x4xbf16>
    %c1_i32_19 = arith.constant 1 : i32
    %29 = arith.addi %1, %c1_i32_19 : i32
    %c0_20 = arith.constant 0 : index
    %c1_21 = arith.constant 1 : index
    %30 = arith.index_cast %29 : i32 to index
    %c0_22 = arith.constant 0 : index
    %c0_23 = arith.constant 0 : index
    %31 = vector.load %arg2[%c0_20, %c1_21, %30, %c0_22, %c0_23] : memref<1x4x9x9x4xbf16, #tpu.memory_space<vmem>>, vector<1x1x8x9x4xbf16>
    %32 = vector.shape_cast %31 : vector<1x1x8x9x4xbf16> to vector<8x9x4xbf16>
    %33 = vector.extract_strided_slice %32 {offsets = [0, 0, 0], sizes = [8, 8, 4], strides = [1, 1, 1]} : vector<8x9x4xbf16> to vector<8x8x4xbf16>
    %34 = vector.extract_strided_slice %27 {offsets = [0, 1, 0], sizes = [8, 8, 4], strides = [1, 1, 1]} : vector<8x9x4xbf16> to vector<8x8x4xbf16>
    %35 = tpu.concatenate %6, %11, %12, %17, %22, %23, %28, %33, %34 in 2 : vector<8x8x4xbf16>, vector<8x8x4xbf16>, vector<8x8x4xbf16>, vector<8x8x4xbf16>, vector<8x8x4xbf16>, vector<8x8x4xbf16>, vector<8x8x4xbf16>, vector<8x8x4xbf16>, vector<8x8x4xbf16> -> vector<8x8x36xbf16>
    %36 = vector.shape_cast %35 : vector<8x8x36xbf16> to vector<64x36xbf16>
    %c0_24 = arith.constant 0 : index
    %c0_25 = arith.constant 0 : index
    %37 = vector.load %arg3[%c0_24, %c0_25] : memref<36x128xbf16, #tpu.memory_space<vmem>>, vector<36x128xbf16>
    %cst = arith.constant dense<0.000000e+00> : vector<64x128xf32>
    %38 = tpu.matmul %36, %37, %cst {dimension_numbers = #tpu.dot_dimension_numbers<[1], [0], [0], [1], [0, 0, 1, 1], [], []>} : vector<64x36xbf16>, vector<36x128xbf16>, vector<64x128xf32> -> vector<64x128xf32>
    %c0_26 = arith.constant 0 : index
    %c0_27 = arith.constant 0 : index
    %39 = vector.load %arg4[%c0_26, %c0_27] : memref<1x128xf32, #tpu.memory_space<vmem>>, vector<1x128xf32>
    %40 = vector.broadcast %39 : vector<1x128xf32> to vector<64x128xf32>
    %41 = arith.addf %38, %40 : vector<64x128xf32>
    %42 = vector.shape_cast %41 : vector<64x128xf32> to vector<1x8x8x128xf32>
    %c0_28 = arith.constant 0 : index
    %c0_29 = arith.constant 0 : index
    %c0_30 = arith.constant 0 : index
    %c0_31 = arith.constant 0 : index
    %43 = vector.load %arg5[%c0_28, %c0_29, %c0_30, %c0_31] : memref<1x8x8x128xf32, #tpu.memory_space<vmem>>, vector<1x8x8x128xf32>
    tpu.vector_store %arg5[%c0_28, %c0_29, %c0_30, %c0_31], %42 {strides = array<i32>} : memref<1x8x8x128xf32, #tpu.memory_space<vmem>>, vector<1x8x8x128xf32>,
    return
  }
  func.func @transform_0(%arg0: i32, %arg1: i32) -> (i32, i32, i32, i32, i32) {
    %c0_i32 = arith.constant 0 : i32
    %c0_i32_0 = arith.constant 0 : i32
    %c0_i32_1 = arith.constant 0 : i32
    %c0_i32_2 = arith.constant 0 : i32
    %c0_i32_3 = arith.constant 0 : i32
    return %arg0, %c0_i32, %c0_i32_0, %c0_i32_1, %c0_i32_2 : i32, i32, i32, i32, i32
  }
  func.func @transform_1(%arg0: i32, %arg1: i32) -> (i32, i32) {
    %c0_i32 = arith.constant 0 : i32
    %c0_i32_0 = arith.constant 0 : i32
    %c0_i32_1 = arith.constant 0 : i32
    return %c0_i32, %c0_i32_0 : i32, i32
  }
  func.func @transform_2(%arg0: i32, %arg1: i32) -> (i32, i32) {
    %c0_i32 = arith.constant 0 : i32
    %c0_i32_0 = arith.constant 0 : i32
    %c0_i32_1 = arith.constant 0 : i32
    return %c0_i32, %c0_i32_0 : i32, i32
  }
  func.func @transform_3(%arg0: i32, %arg1: i32) -> (i32, i32, i32, i32) {
    %c0_i32 = arith.constant 0 : i32
    %c0_i32_0 = arith.constant 0 : i32
    %c0_i32_1 = arith.constant 0 : i32
    return %arg0, %arg1, %c0_i32, %c0_i32_0 : i32, i32, i32, i32
  }
}

</mosaic_0001>

<llo_original>
// kernel: tpu_custom_call.1
$region0: #{tpu_custom_call.1}
  #allocation0 [shape = 'u32[]', space=smem, size = 0x4, offset = 0x4, fixed_abs, tag = 'smem constant byte address 0x4 - core index']
  #allocation1 [shape = 'u32[144,128]{1,0:T(1,128)}', space=vmem, size = 0x12000, scoped, tag = 'internal scratch']
  %s0 = inlined_call_operand.vmem [shape: bf16[2,4,9,9,4], index: 0, kind: input, shape index: {}]
  %s1 = inlined_call_operand.vmem [shape: bf16[36,128], index: 1, kind: input, shape index: {}]
  %s2 = inlined_call_operand.vmem [shape: f32[1,128], index: 2, kind: input, shape index: {}]
  %s3 = inlined_call_operand.hbm [shape: f32[2,8,8,128], index: 3, kind: output, shape index: {}]
  %s4 = sld [smem:[#allocation0]]
  $region45: #{tpu_custom_call.1} parent=0
    _
  %s6 = ssub.s32 1, %s4
  %s7 = scalar_select 0, %s6, %s4
  $region1: #{tpu_custom_call.1} parent=0
    #allocation2 [shape = 'u8[65536]{0}', space=vmem, size = 0x10000, scoped, tag = 'output window, operand 0']
    #allocation3 [shape = 's32[2]{0}', space=sflag, size = 0x8, scoped, tag = 'scoped memory for tpu_custom_call.1']
    %8 = vsyncpa [#allocation3], 0
    %s9 = scalar_lea.sflag [#allocation3], 1
    %10 = vsyncpa %s9, 0
    loop: start=0, step=1, limit=4
    $region2: #{tpu_custom_call.1} parent=1 // loop_pre_header
      _
    $region3: #{tpu_custom_call.1} parent=1 // loop_header
      %s12 = sphi 0, %s16
      %p13 = scmp.ge.s32.totalorder %s12, 4
      %s19 = sphi 0, %s31
      %s20 = sphi 0, %s27
      %s21 = sphi 0, %s19
      %s22 = sphi 0, %s20
      %s23 = sphi 0, %s21
      %s24 = sphi 0, %s22
      %s34 = sphi 0, %s36
      %s37 = sphi 0, %s34
      %s38 = sphi 0, %s37
      %s54 = sphi 0, %s38
      %s58 = sphi 0, %s58
      %s60 = sphi 0, %s58
      %s61 = sphi 0, %s60
      %s75 = sphi 0, %s61
      %s79 = sphi 0, %s79
      %s81 = sphi 0, %s79
      %s82 = sphi 0, %s81
      %s96 = sphi 0, %s82
      %s104 = sphi 0, %s106
      %s107 = sphi 0, %s104
      %s108 = sphi 0, %s107
      %s124 = sphi 0, %s108
    $region4: #{tpu_custom_call.1} parent=1 // loop_header_branch
      %15 = sbr.rel (%p13) target = $region8
    $region5: #{tpu_custom_call.1} parent=1 // loop_body
      %s17 = ssub.s32 %s12, 1
      %s18 = ssub.s32 %s12, 2
      %s25 = sadd.s32 1, %s20
      %p26 = scmp.ge.s32.totalorder %s25, 1
      %s27 = scalar_select %p26, 0, %s25
      %s28 = sadd.s32 1, %s19
      %s29 = scalar_select %p26, %s28, %s19
      %p30 = scmp.ge.s32.totalorder %s29, 2
      %s31 = scalar_select %p30, 0, %s29
      %s32 = ssub.s32 %s19, %s31
      %p33 = scmp.eq.s32.totalorder %s32, 0
      %s35 = sadd.s32 %s34, 1
      %s36 = scalar_select %p33, %s34, %s35
      %p39 = pneg %p33
      %p40 = scmp.eq.s32.totalorder %s12, 1
      %p41 = por %p39, %p40
      %p42 = scmp.ne.s32.totalorder %s34, %s37
      %p43 = scmp.eq.s32.totalorder %s12, 0
      %p44 = por %p42, %p43
      %p45 = scmp.ne.s32.totalorder %s34, %s37
      %p46 = scmp.eq.s32.totalorder %s17, 1
      %p47 = por %p45, %p46
      %p48 = scmp.ne.s32.totalorder %s37, %s38
      %p49 = scmp.eq.s32.totalorder %s17, 0
      %p50 = por %p48, %p49
      %p51 = scmp.ne.s32.totalorder %s37, %s38
      %p52 = scmp.eq.s32.totalorder %s18, 1
      %p53 = por %p51, %p52
      %p55 = scmp.ne.s32.totalorder %s38, %s54
      %p56 = scmp.eq.s32.totalorder %s18, 0
      %p57 = por %p55, %p56
      %s59 = sadd.s32 %s58, 1
      %p62 = scmp.eq.s32.totalorder %s12, 1
      %p63 = scmp.ne.s32.totalorder %s58, %s60
      %p64 = scmp.eq.s32.totalorder %s12, 0
      %p65 = por %p63, %p64
      %p66 = scmp.ne.s32.totalorder %s58, %s60
      %p67 = scmp.eq.s32.totalorder %s17, 1
      %p68 = por %p66, %p67
      %p69 = scmp.ne.s32.totalorder %s60, %s61
      %p70 = scmp.eq.s32.totalorder %s17, 0
      %p71 = por %p69, %p70
      %p72 = scmp.ne.s32.totalorder %s60, %s61
      %p73 = scmp.eq.s32.totalorder %s18, 1
      %p74 = por %p72, %p73
      %p76 = scmp.ne.s32.totalorder %s61, %s75
      %p77 = scmp.eq.s32.totalorder %s18, 0
      %p78 = por %p76, %p77
      %s80 = sadd.s32 %s79, 1
      %p83 = scmp.eq.s32.totalorder %s12, 1
      %p84 = scmp.ne.s32.totalorder %s79, %s81
      %p85 = scmp.eq.s32.totalorder %s12, 0
      %p86 = por %p84, %p85
      %p87 = scmp.ne.s32.totalorder %s79, %s81
      %p88 = scmp.eq.s32.totalorder %s17, 1
      %p89 = por %p87, %p88
      %p90 = scmp.ne.s32.totalorder %s81, %s82
      %p91 = scmp.eq.s32.totalorder %s17, 0
      %p92 = por %p90, %p91
      %p93 = scmp.ne.s32.totalorder %s81, %s82
      %p94 = scmp.eq.s32.totalorder %s18, 1
      %p95 = por %p93, %p94
      %p97 = scmp.ne.s32.totalorder %s82, %s96
      %p98 = scmp.eq.s32.totalorder %s18, 0
      %p99 = por %p97, %p98
      %s100 = ssub.s32 %s19, %s31
      %s101 = ssub.s32 %s20, %s27
      %s102 = sor.u32 %s100, %s101
      %p103 = scmp.eq.s32.totalorder %s102, 0
      %s105 = sadd.s32 %s104, 1
      %s106 = scalar_select %p103, %s104, %s105
      %p109 = pneg %p103
      %p110 = scmp.eq.s32.totalorder %s12, 1
      %p111 = por %p109, %p110
      %p112 = scmp.ne.s32.totalorder %s104, %s107
      %p113 = scmp.eq.s32.totalorder %s12, 0
      %p114 = por %p112, %p113
      %p115 = scmp.ne.s32.totalorder %s104, %s107
      %p116 = scmp.eq.s32.totalorder %s17, 1
      %p117 = por %p115, %p116
      %p118 = scmp.ne.s32.totalorder %s107, %s108
      %p119 = scmp.eq.s32.totalorder %s17, 0
      %p120 = por %p118, %p119
      %p121 = scmp.ne.s32.totalorder %s107, %s108
      %p122 = scmp.eq.s32.totalorder %s18, 1
      %p123 = por %p121, %p122
      %p125 = scmp.ne.s32.totalorder %s108, %s124
      %p126 = scmp.eq.s32.totalorder %s18, 0
      %p127 = por %p125, %p126
      %p128 = scmp.le.s32.totalorder 1, %s12
      %p129 = scmp.lt.s32.totalorder %s12, 3
      %p130 = pnand %p128, %p129
      %p131 = pneg %p130
      // Predicated region
      $region9: #{tpu_custom_call.1} parent=5 // pred_check
        _
      $region10: #{tpu_custom_call.1} parent=5 // pred_check_branch
        %133 = sbr.rel (%p130) target = $region12
      $region11: #{tpu_custom_call.1} parent=5 // pred_region
        %s134 = ssub.s32 %s12, 1
        // Predicated region
        $region13: #{tpu_custom_call.1} parent=11 // pred_check
          %p135 = pneg %p71
        $region14: #{tpu_custom_call.1} parent=11 // pred_check_branch
          %137 = sbr.rel (%p135) target = $region16
        $region15: #{tpu_custom_call.1} parent=11 // pred_region
          _
        $region16: #{tpu_custom_call.1} parent=11 // pred_fallthru
          _
        // Predicated region
        $region17: #{tpu_custom_call.1} parent=11 // pred_check
          %p138 = pneg %p92
        $region18: #{tpu_custom_call.1} parent=11 // pred_check_branch
          %140 = sbr.rel (%p138) target = $region20
        $region19: #{tpu_custom_call.1} parent=11 // pred_region
          _
        $region20: #{tpu_custom_call.1} parent=11 // pred_fallthru
          _
      $region12: #{tpu_custom_call.1} parent=5 // pred_fallthru
        _
      %p141 = scmp.lt.s32.totalorder %s12, 2
      // Predicated region
      $region21: #{tpu_custom_call.1} parent=5 // pred_check
        %p142 = pneg %p141
      $region22: #{tpu_custom_call.1} parent=5 // pred_check_branch
        %144 = sbr.rel (%p142) target = $region24
      $region23: #{tpu_custom_call.1} parent=5 // pred_region
        // Predicated region
        $region25: #{tpu_custom_call.1} parent=23 // pred_check
          %p145 = pneg %p44
        $region26: #{tpu_custom_call.1} parent=23 // pred_check_branch
          %147 = sbr.rel (%p145) target = $region28
        $region27: #{tpu_custom_call.1} parent=23 // pred_region
          %p148 = scmp.lt.s32.totalorder %s19, 1
          %s149 = scalar_select %p148, %s19, 1
          %s150 = smul.addr %s149, 72
          %s151 = smul.addr %s150, 4
          %s152 = scalar_lea.vmem %s0, %s151
        $region28: #{tpu_custom_call.1} parent=23 // pred_fallthru
          _
      $region24: #{tpu_custom_call.1} parent=5 // pred_fallthru
        _
      %p153 = scmp.le.s32.totalorder 1, %s12
      %p154 = scmp.lt.s32.totalorder %s12, 3
      %p155 = pnand %p153, %p154
      %p156 = pneg %p155
      // Predicated region
      $region29: #{tpu_custom_call.1} parent=5 // pred_check
        _
      $region30: #{tpu_custom_call.1} parent=5 // pred_check_branch
        %158 = sbr.rel (%p155) target = $region32
      $region31: #{tpu_custom_call.1} parent=5 // pred_region
        %s159 = ssub.s32 %s12, 1
        %p160 = scmp.lt.s32.totalorder %s21, 1
        %s161 = scalar_select %p160, %s21, 1
        %s162 = smul.addr %s161, 72
        %s163 = smul.addr %s162, 4
        %s164 = scalar_lea.vmem %s0, %s163
        %p165 = pneg %p50
        %p166 = pneg %p47
        %p167 = pneg %p71
        %p168 = pneg %p68
        %p169 = pneg %p92
        %p170 = pneg %p89
        %p171 = pneg %p120
        %p172 = pneg %p117
        %s173 = sand.u32 %s107, 1
        %s174 = scalar_lea.sflag [#allocation3], %s173
        %s175 = sand.u32 %s107, 1
        %s176 = smul.addr %s175, 64
        %s177 = scalar_lea.vmem [#allocation2], %s176
        %p178 = scmp.lt.s32.totalorder %s21, 1
        %s179 = scalar_select %p178, %s21, 1
        %s180 = smul.addr %s179, 72
        %s181 = smul.addr %s180, 4
        %s182 = scalar_lea.vmem %s0, %s181
        %s183 = smul.u32 8, %s22
        %s185 = smul.u32 %s22, 8
        %s186 = smul.u32 %s185, 2
        %s187 = smul.addr %s186, 4
        %s188 = scalar_lea.vmem %s182, %s187
        %v189 = vld [vmem:[%s188] sm:$0xf]
        %v190 = vld [vmem:[%s188 + $0x4] sm:$0x1]
        %v191 = vld [vmem:[%s188 + $0x8] sm:$0xf]
        %v192 = vld [vmem:[%s188 + $0xc] sm:$0x1]
        %v193 = vld [vmem:[%s188 + $0x10] sm:$0xf]
        %v194 = vld [vmem:[%s188 + $0x14] sm:$0x1]
        %v195 = vld [vmem:[%s188 + $0x18] sm:$0xf]
        %v196 = vld [vmem:[%s188 + $0x1c] sm:$0x1]
        %v197 = vld [vmem:[%s188 + $0x20] sm:$0xf]
        %v198 = vld [vmem:[%s188 + $0x24] sm:$0x1]
        %v199 = vld [vmem:[%s188 + $0x28] sm:$0xf]
        %v200 = vld [vmem:[%s188 + $0x2c] sm:$0x1]
        %v201 = vld [vmem:[%s188 + $0x30] sm:$0xf]
        %v202 = vld [vmem:[%s188 + $0x34] sm:$0x1]
        %v203 = vld [vmem:[%s188 + $0x38] sm:$0xf]
        %v204 = vld [vmem:[%s188 + $0x3c] sm:$0x1]
        %s205 = sadd.s32 %s186, 18
        %s206 = smul.addr %s205, 4
        %s207 = scalar_lea.vmem %s182, %s206
        %v208 = vld [vmem:[%s207] sm:$0xf]
        %v209 = vld [vmem:[%s207 + $0x8] sm:$0xf]
        %v210 = vld [vmem:[%s207 + $0x10] sm:$0xf]
        %v211 = vld [vmem:[%s207 + $0x18] sm:$0xf]
        %v212 = vld [vmem:[%s207 + $0x20] sm:$0xf]
        %v213 = vld [vmem:[%s207 + $0x28] sm:$0xf]
        %v214 = vld [vmem:[%s207 + $0x30] sm:$0xf]
        %v215 = vld [vmem:[%s207 + $0x38] sm:$0xf]
        %s216 = sadd.s32 %s186, 36
        %s217 = smul.addr %s216, 4
        %s218 = scalar_lea.vmem %s182, %s217
        %v219 = vld [vmem:[%s218] sm:$0xf]
        %v220 = vld [vmem:[%s218 + $0x4] sm:$0x1]
        %v221 = vld [vmem:[%s218 + $0x8] sm:$0xf]
        %v222 = vld [vmem:[%s218 + $0xc] sm:$0x1]
        %v223 = vld [vmem:[%s218 + $0x10] sm:$0xf]
        %v224 = vld [vmem:[%s218 + $0x14] sm:$0x1]
        %v225 = vld [vmem:[%s218 + $0x18] sm:$0xf]
        %v226 = vld [vmem:[%s218 + $0x1c] sm:$0x1]
        %v227 = vld [vmem:[%s218 + $0x20] sm:$0xf]
        %v228 = vld [vmem:[%s218 + $0x24] sm:$0x1]
        %v229 = vld [vmem:[%s218 + $0x28] sm:$0xf]
        %v230 = vld [vmem:[%s218 + $0x2c] sm:$0x1]
        %v231 = vld [vmem:[%s218 + $0x30] sm:$0xf]
        %v232 = vld [vmem:[%s218 + $0x34] sm:$0x1]
        %v233 = vld [vmem:[%s218 + $0x38] sm:$0xf]
        %v234 = vld [vmem:[%s218 + $0x3c] sm:$0x1]
        %s235 = sadd.s32 %s186, 54
        %s236 = smul.addr %s235, 4
        %s237 = scalar_lea.vmem %s182, %s236
        %v238 = vld [vmem:[%s237] sm:$0xf]
        %v239 = vld [vmem:[%s237 + $0x8] sm:$0xf]
        %v240 = vld [vmem:[%s237 + $0x10] sm:$0xf]
        %v241 = vld [vmem:[%s237 + $0x18] sm:$0xf]
        %v242 = vld [vmem:[%s237 + $0x20] sm:$0xf]
        %v243 = vld [vmem:[%s237 + $0x28] sm:$0xf]
        %v244 = vld [vmem:[%s237 + $0x30] sm:$0xf]
        %v245 = vld [vmem:[%s237 + $0x38] sm:$0xf]
        %s246 = sadd.s32 %s185, 1
        %s247 = smul.u32 %s246, 2
        %s248 = smul.addr %s247, 4
        %s249 = scalar_lea.vmem %s182, %s248
        %v250 = vld [vmem:[%s249] sm:$0xf]
        %v251 = vld [vmem:[%s249 + $0x4] sm:$0x1]
        %v252 = vld [vmem:[%s249 + $0x8] sm:$0xf]
        %v253 = vld [vmem:[%s249 + $0xc] sm:$0x1]
        %v254 = vld [vmem:[%s249 + $0x10] sm:$0xf]
        %v255 = vld [vmem:[%s249 + $0x14] sm:$0x1]
        %v256 = vld [vmem:[%s249 + $0x18] sm:$0xf]
        %v257 = vld [vmem:[%s249 + $0x1c] sm:$0x1]
        %v258 = vld [vmem:[%s249 + $0x20] sm:$0xf]
        %v259 = vld [vmem:[%s249 + $0x24] sm:$0x1]
        %v260 = vld [vmem:[%s249 + $0x28] sm:$0xf]
        %v261 = vld [vmem:[%s249 + $0x2c] sm:$0x1]
        %v262 = vld [vmem:[%s249 + $0x30] sm:$0xf]
        %v263 = vld [vmem:[%s249 + $0x34] sm:$0x1]
        %v264 = vld [vmem:[%s249 + $0x38] sm:$0xf]
        %v265 = vld [vmem:[%s249 + $0x3c] sm:$0x1]
        %s266 = sadd.s32 %s247, 18
        %s267 = smul.addr %s266, 4
        %s268 = scalar_lea.vmem %s182, %s267
        %v269 = vld [vmem:[%s268] sm:$0xf]
        %v270 = vld [vmem:[%s268 + $0x8] sm:$0xf]
        %v271 = vld [vmem:[%s268 + $0x10] sm:$0xf]
        %v272 = vld [vmem:[%s268 + $0x18] sm:$0xf]
        %v273 = vld [vmem:[%s268 + $0x20] sm:$0xf]
        %v274 = vld [vmem:[%s268 + $0x28] sm:$0xf]
        %v275 = vld [vmem:[%s268 + $0x30] sm:$0xf]
        %v276 = vld [vmem:[%s268 + $0x38] sm:$0xf]
        %v285 = vunpack.c.l.b16 %v208
        %v286 = vunpack.c.l.b16 %v209
        %v287 = vunpack.c.l.b16 %v210
        %v288 = vunpack.c.l.b16 %v211
        %v289 = vunpack.c.l.b16 %v212
        %v290 = vunpack.c.l.b16 %v213
        %v291 = vunpack.c.l.b16 %v214
        %v292 = vunpack.c.l.b16 %v215
        %v293 = vpack.c.b16 %v285, %v285
        %v294 = vpack.c.b16 %v286, %v286
        %v295 = vpack.c.b16 %v287, %v287
        %v296 = vpack.c.b16 %v288, %v288
        %v297 = vpack.c.b16 %v289, %v289
        %v298 = vpack.c.b16 %v290, %v290
        %v299 = vpack.c.b16 %v291, %v291
        %v300 = vpack.c.b16 %v292, %v292
        %301 = vrot.lane.b32.xlu0 %v293, 4
        %v302 = vpop.permute.xlu0 %301
        %303 = vrot.lane.b32.xlu0 %v294, 4
        %v304 = vpop.permute.xlu0 %303
        %305 = vrot.lane.b32.xlu0 %v295, 4
        %v306 = vpop.permute.xlu0 %305
        %307 = vrot.lane.b32.xlu0 %v296, 4
        %v308 = vpop.permute.xlu0 %307
        %309 = vrot.lane.b32.xlu0 %v297, 4
        %v310 = vpop.permute.xlu0 %309
        %311 = vrot.lane.b32.xlu0 %v298, 4
        %v312 = vpop.permute.xlu0 %311
        %313 = vrot.lane.b32.xlu0 %v299, 4
        %v314 = vpop.permute.xlu0 %313
        %315 = vrot.lane.b32.xlu0 %v300, 4
        %v316 = vpop.permute.xlu0 %315
        %v333 = vunpack.c.l.b16 %v189
        %v334 = vunpack.c.l.b16 %v190
        %v335 = vunpack.c.l.b16 %v191
        %v336 = vunpack.c.l.b16 %v192
        %v337 = vunpack.c.l.b16 %v193
        %v338 = vunpack.c.l.b16 %v194
        %v339 = vunpack.c.l.b16 %v195
        %v340 = vunpack.c.l.b16 %v196
        %v341 = vunpack.c.l.b16 %v197
        %v342 = vunpack.c.l.b16 %v198
        %v343 = vunpack.c.l.b16 %v199
        %v344 = vunpack.c.l.b16 %v200
        %v345 = vunpack.c.l.b16 %v201
        %v346 = vunpack.c.l.b16 %v202
        %v347 = vunpack.c.l.b16 %v203
        %v348 = vunpack.c.l.b16 %v204
        %v349 = vpack.c.b16 %v334, %v333
        %v350 = vpack.c.b16 %v336, %v335
        %v351 = vpack.c.b16 %v338, %v337
        %v352 = vpack.c.b16 %v340, %v339
        %v353 = vpack.c.b16 %v342, %v341
        %v354 = vpack.c.b16 %v344, %v343
        %v355 = vpack.c.b16 %v346, %v345
        %v356 = vpack.c.b16 %v348, %v347
        %v358 = vshrl.u32 %v349, 16
        %v360 = vshll.u32 %v349, 16
        %v362 = vrot.slane %v360, 1
        %v363 = vor.u32 %v358, %v362
        %v365 = vshrl.u32 %v350, 16
        %v367 = vshll.u32 %v350, 16
        %v369 = vrot.slane %v367, 1
        %v370 = vor.u32 %v365, %v369
        %v372 = vshrl.u32 %v351, 16
        %v374 = vshll.u32 %v351, 16
        %v376 = vrot.slane %v374, 1
        %v377 = vor.u32 %v372, %v376
        %v379 = vshrl.u32 %v352, 16
        %v381 = vshll.u32 %v352, 16
        %v383 = vrot.slane %v381, 1
        %v384 = vor.u32 %v379, %v383
        %v386 = vshrl.u32 %v353, 16
        %v388 = vshll.u32 %v353, 16
        %v390 = vrot.slane %v388, 1
        %v391 = vor.u32 %v386, %v390
        %v393 = vshrl.u32 %v354, 16
        %v395 = vshll.u32 %v354, 16
        %v397 = vrot.slane %v395, 1
        %v398 = vor.u32 %v393, %v397
        %v400 = vshrl.u32 %v355, 16
        %v402 = vshll.u32 %v355, 16
        %v404 = vrot.slane %v402, 1
        %v405 = vor.u32 %v400, %v404
        %v407 = vshrl.u32 %v356, 16
        %v409 = vshll.u32 %v356, 16
        %v411 = vrot.slane %v409, 1
        %v412 = vor.u32 %v407, %v411
        %413 = vrot.lane.b32.xlu0 %v363, 8
        %v414 = vpop.permute.xlu0 %413
        %415 = vrot.lane.b32.xlu0 %v370, 8
        %v416 = vpop.permute.xlu0 %415
        %417 = vrot.lane.b32.xlu0 %v377, 8
        %v418 = vpop.permute.xlu0 %417
        %419 = vrot.lane.b32.xlu0 %v384, 8
        %v420 = vpop.permute.xlu0 %419
        %421 = vrot.lane.b32.xlu0 %v391, 8
        %v422 = vpop.permute.xlu0 %421
        %423 = vrot.lane.b32.xlu0 %v398, 8
        %v424 = vpop.permute.xlu0 %423
        %425 = vrot.lane.b32.xlu0 %v405, 8
        %v426 = vpop.permute.xlu0 %425
        %427 = vrot.lane.b32.xlu0 %v412, 8
        %v428 = vpop.permute.xlu0 %427
        %v437 = vunpack.c.l.b16 %v219
        %v438 = vunpack.c.l.b16 %v221
        %v439 = vunpack.c.l.b16 %v223
        %v440 = vunpack.c.l.b16 %v225
        %v441 = vunpack.c.l.b16 %v227
        %v442 = vunpack.c.l.b16 %v229
        %v443 = vunpack.c.l.b16 %v231
        %v444 = vunpack.c.l.b16 %v233
        %v445 = vpack.c.b16 %v437, %v437
        %v446 = vpack.c.b16 %v438, %v438
        %v447 = vpack.c.b16 %v439, %v439
        %v448 = vpack.c.b16 %v440, %v440
        %v449 = vpack.c.b16 %v441, %v441
        %v450 = vpack.c.b16 %v442, %v442
        %v451 = vpack.c.b16 %v443, %v443
        %v452 = vpack.c.b16 %v444, %v444
        %453 = vrot.lane.b32.xlu0 %v445, 12
        %v454 = vpop.permute.xlu0 %453
        %455 = vrot.lane.b32.xlu0 %v446, 12
        %v456 = vpop.permute.xlu0 %455
        %457 = vrot.lane.b32.xlu0 %v447, 12
        %v458 = vpop.permute.xlu0 %457
        %459 = vrot.lane.b32.xlu0 %v448, 12
        %v460 = vpop.permute.xlu0 %459
        %461 = vrot.lane.b32.xlu0 %v449, 12
        %v462 = vpop.permute.xlu0 %461
        %463 = vrot.lane.b32.xlu0 %v450, 12
        %v464 = vpop.permute.xlu0 %463
        %465 = vrot.lane.b32.xlu0 %v451, 12
        %v466 = vpop.permute.xlu0 %465
        %467 = vrot.lane.b32.xlu0 %v452, 12
        %v468 = vpop.permute.xlu0 %467
        %v477 = vunpack.c.l.b16 %v238
        %v478 = vunpack.c.l.b16 %v239
        %v479 = vunpack.c.l.b16 %v240
        %v480 = vunpack.c.l.b16 %v241
        %v481 = vunpack.c.l.b16 %v242
        %v482 = vunpack.c.l.b16 %v243
        %v483 = vunpack.c.l.b16 %v244
        %v484 = vunpack.c.l.b16 %v245
        %v485 = vpack.c.b16 %v477, %v477
        %v486 = vpack.c.b16 %v478, %v478
        %v487 = vpack.c.b16 %v479, %v479
        %v488 = vpack.c.b16 %v480, %v480
        %v489 = vpack.c.b16 %v481, %v481
        %v490 = vpack.c.b16 %v482, %v482
        %v491 = vpack.c.b16 %v483, %v483
        %v492 = vpack.c.b16 %v484, %v484
        %493 = vrot.lane.b32.xlu0 %v485, 16
        %v494 = vpop.permute.xlu0 %493
        %495 = vrot.lane.b32.xlu0 %v486, 16
        %v496 = vpop.permute.xlu0 %495
        %497 = vrot.lane.b32.xlu0 %v487, 16
        %v498 = vpop.permute.xlu0 %497
        %499 = vrot.lane.b32.xlu0 %v488, 16
        %v500 = vpop.permute.xlu0 %499
        %501 = vrot.lane.b32.xlu0 %v489, 16
        %v502 = vpop.permute.xlu0 %501
        %503 = vrot.lane.b32.xlu0 %v490, 16
        %v504 = vpop.permute.xlu0 %503
        %505 = vrot.lane.b32.xlu0 %v491, 16
        %v506 = vpop.permute.xlu0 %505
        %507 = vrot.lane.b32.xlu0 %v492, 16
        %v508 = vpop.permute.xlu0 %507
        %v517 = vunpack.c.l.b16 %v220
        %v518 = vunpack.c.l.b16 %v222
        %v519 = vunpack.c.l.b16 %v224
        %v520 = vunpack.c.l.b16 %v226
        %v521 = vunpack.c.l.b16 %v228
        %v522 = vunpack.c.l.b16 %v230
        %v523 = vunpack.c.l.b16 %v232
        %v524 = vunpack.c.l.b16 %v234
        %v525 = vpack.c.b16 %v517, %v437
        %v526 = vpack.c.b16 %v518, %v438
        %v527 = vpack.c.b16 %v519, %v439
        %v528 = vpack.c.b16 %v520, %v440
        %v529 = vpack.c.b16 %v521, %v441
        %v530 = vpack.c.b16 %v522, %v442
        %v531 = vpack.c.b16 %v523, %v443
        %v532 = vpack.c.b16 %v524, %v444
        %v534 = vshrl.u32 %v525, 16
        %v536 = vshll.u32 %v525, 16
        %v538 = vrot.slane %v536, 1
        %v539 = vor.u32 %v534, %v538
        %v541 = vshrl.u32 %v526, 16
        %v543 = vshll.u32 %v526, 16
        %v545 = vrot.slane %v543, 1
        %v546 = vor.u32 %v541, %v545
        %v548 = vshrl.u32 %v527, 16
        %v550 = vshll.u32 %v527, 16
        %v552 = vrot.slane %v550, 1
        %v553 = vor.u32 %v548, %v552
        %v555 = vshrl.u32 %v528, 16
        %v557 = vshll.u32 %v528, 16
        %v559 = vrot.slane %v557, 1
        %v560 = vor.u32 %v555, %v559
        %v562 = vshrl.u32 %v529, 16
        %v564 = vshll.u32 %v529, 16
        %v566 = vrot.slane %v564, 1
        %v567 = vor.u32 %v562, %v566
        %v569 = vshrl.u32 %v530, 16
        %v571 = vshll.u32 %v530, 16
        %v573 = vrot.slane %v571, 1
        %v574 = vor.u32 %v569, %v573
        %v576 = vshrl.u32 %v531, 16
        %v578 = vshll.u32 %v531, 16
        %v580 = vrot.slane %v578, 1
        %v581 = vor.u32 %v576, %v580
        %v583 = vshrl.u32 %v532, 16
        %v585 = vshll.u32 %v532, 16
        %v587 = vrot.slane %v585, 1
        %v588 = vor.u32 %v583, %v587
        %589 = vrot.lane.b32.xlu0 %v539, 20
        %v590 = vpop.permute.xlu0 %589
        %591 = vrot.lane.b32.xlu0 %v546, 20
        %v592 = vpop.permute.xlu0 %591
        %593 = vrot.lane.b32.xlu0 %v553, 20
        %v594 = vpop.permute.xlu0 %593
        %595 = vrot.lane.b32.xlu0 %v560, 20
        %v596 = vpop.permute.xlu0 %595
        %597 = vrot.lane.b32.xlu0 %v567, 20
        %v598 = vpop.permute.xlu0 %597
        %599 = vrot.lane.b32.xlu0 %v574, 20
        %v600 = vpop.permute.xlu0 %599
        %601 = vrot.lane.b32.xlu0 %v581, 20
        %v602 = vpop.permute.xlu0 %601
        %603 = vrot.lane.b32.xlu0 %v588, 20
        %v604 = vpop.permute.xlu0 %603
        %v613 = vunpack.c.l.b16 %v250
        %v614 = vunpack.c.l.b16 %v252
        %v615 = vunpack.c.l.b16 %v254
        %v616 = vunpack.c.l.b16 %v256
        %v617 = vunpack.c.l.b16 %v258
        %v618 = vunpack.c.l.b16 %v260
        %v619 = vunpack.c.l.b16 %v262
        %v620 = vunpack.c.l.b16 %v264
        %v621 = vpack.c.b16 %v613, %v613
        %v622 = vpack.c.b16 %v614, %v614
        %v623 = vpack.c.b16 %v615, %v615
        %v624 = vpack.c.b16 %v616, %v616
        %v625 = vpack.c.b16 %v617, %v617
        %v626 = vpack.c.b16 %v618, %v618
        %v627 = vpack.c.b16 %v619, %v619
        %v628 = vpack.c.b16 %v620, %v620
        %629 = vrot.lane.b32.xlu0 %v621, 24
        %v630 = vpop.permute.xlu0 %629
        %631 = vrot.lane.b32.xlu0 %v622, 24
        %v632 = vpop.permute.xlu0 %631
        %633 = vrot.lane.b32.xlu0 %v623, 24
        %v634 = vpop.permute.xlu0 %633
        %635 = vrot.lane.b32.xlu0 %v624, 24
        %v636 = vpop.permute.xlu0 %635
        %637 = vrot.lane.b32.xlu0 %v625, 24
        %v638 = vpop.permute.xlu0 %637
        %639 = vrot.lane.b32.xlu0 %v626, 24
        %v640 = vpop.permute.xlu0 %639
        %641 = vrot.lane.b32.xlu0 %v627, 24
        %v642 = vpop.permute.xlu0 %641
        %643 = vrot.lane.b32.xlu0 %v628, 24
        %v644 = vpop.permute.xlu0 %643
        %v653 = vunpack.c.l.b16 %v269
        %v654 = vunpack.c.l.b16 %v270
        %v655 = vunpack.c.l.b16 %v271
        %v656 = vunpack.c.l.b16 %v272
        %v657 = vunpack.c.l.b16 %v273
        %v658 = vunpack.c.l.b16 %v274
        %v659 = vunpack.c.l.b16 %v275
        %v660 = vunpack.c.l.b16 %v276
        %v661 = vpack.c.b16 %v653, %v653
        %v662 = vpack.c.b16 %v654, %v654
        %v663 = vpack.c.b16 %v655, %v655
        %v664 = vpack.c.b16 %v656, %v656
        %v665 = vpack.c.b16 %v657, %v657
        %v666 = vpack.c.b16 %v658, %v658
        %v667 = vpack.c.b16 %v659, %v659
        %v668 = vpack.c.b16 %v660, %v660
        %669 = vrot.lane.b32.xlu0 %v661, 28
        %v670 = vpop.permute.xlu0 %669
        %671 = vrot.lane.b32.xlu0 %v662, 28
        %v672 = vpop.permute.xlu0 %671
        %673 = vrot.lane.b32.xlu0 %v663, 28
        %v674 = vpop.permute.xlu0 %673
        %675 = vrot.lane.b32.xlu0 %v664, 28
        %v676 = vpop.permute.xlu0 %675
        %677 = vrot.lane.b32.xlu0 %v665, 28
        %v678 = vpop.permute.xlu0 %677
        %679 = vrot.lane.b32.xlu0 %v666, 28
        %v680 = vpop.permute.xlu0 %679
        %681 = vrot.lane.b32.xlu0 %v667, 28
        %v682 = vpop.permute.xlu0 %681
        %683 = vrot.lane.b32.xlu0 %v668, 28
        %v684 = vpop.permute.xlu0 %683
        %v693 = vunpack.c.l.b16 %v251
        %v694 = vunpack.c.l.b16 %v253
        %v695 = vunpack.c.l.b16 %v255
        %v696 = vunpack.c.l.b16 %v257
        %v697 = vunpack.c.l.b16 %v259
        %v698 = vunpack.c.l.b16 %v261
        %v699 = vunpack.c.l.b16 %v263
        %v700 = vunpack.c.l.b16 %v265
        %v701 = vpack.c.b16 %v693, %v613
        %v702 = vpack.c.b16 %v694, %v614
        %v703 = vpack.c.b16 %v695, %v615
        %v704 = vpack.c.b16 %v696, %v616
        %v705 = vpack.c.b16 %v697, %v617
        %v706 = vpack.c.b16 %v698, %v618
        %v707 = vpack.c.b16 %v699, %v619
        %v708 = vpack.c.b16 %v700, %v620
        %v710 = vshrl.u32 %v701, 16
        %v712 = vshll.u32 %v701, 16
        %v714 = vrot.slane %v712, 1
        %v715 = vor.u32 %v710, %v714
        %v717 = vshrl.u32 %v702, 16
        %v719 = vshll.u32 %v702, 16
        %v721 = vrot.slane %v719, 1
        %v722 = vor.u32 %v717, %v721
        %v724 = vshrl.u32 %v703, 16
        %v726 = vshll.u32 %v703, 16
        %v728 = vrot.slane %v726, 1
        %v729 = vor.u32 %v724, %v728
        %v731 = vshrl.u32 %v704, 16
        %v733 = vshll.u32 %v704, 16
        %v735 = vrot.slane %v733, 1
        %v736 = vor.u32 %v731, %v735
        %v738 = vshrl.u32 %v705, 16
        %v740 = vshll.u32 %v705, 16
        %v742 = vrot.slane %v740, 1
        %v743 = vor.u32 %v738, %v742
        %v745 = vshrl.u32 %v706, 16
        %v747 = vshll.u32 %v706, 16
        %v749 = vrot.slane %v747, 1
        %v750 = vor.u32 %v745, %v749
        %v752 = vshrl.u32 %v707, 16
        %v754 = vshll.u32 %v707, 16
        %v756 = vrot.slane %v754, 1
        %v757 = vor.u32 %v752, %v756
        %v759 = vshrl.u32 %v708, 16
        %v761 = vshll.u32 %v708, 16
        %v763 = vrot.slane %v761, 1
        %v764 = vor.u32 %v759, %v763
        %765 = vrot.lane.b32.xlu0 %v715, 32
        %v766 = vpop.permute.xlu0 %765
        %767 = vrot.lane.b32.xlu0 %v722, 32
        %v768 = vpop.permute.xlu0 %767
        %769 = vrot.lane.b32.xlu0 %v729, 32
        %v770 = vpop.permute.xlu0 %769
        %771 = vrot.lane.b32.xlu0 %v736, 32
        %v772 = vpop.permute.xlu0 %771
        %773 = vrot.lane.b32.xlu0 %v743, 32
        %v774 = vpop.permute.xlu0 %773
        %775 = vrot.lane.b32.xlu0 %v750, 32
        %v776 = vpop.permute.xlu0 %775
        %777 = vrot.lane.b32.xlu0 %v757, 32
        %v778 = vpop.permute.xlu0 %777
        %779 = vrot.lane.b32.xlu0 %v764, 32
        %v780 = vpop.permute.xlu0 %779
        %vm781 = vcmask 31744
        %v784 = vsel %vm781, %v189, %v302
        %v787 = vsel %vm781, %v191, %v304
        %v790 = vsel %vm781, %v193, %v306
        %v793 = vsel %vm781, %v195, %v308
        %v796 = vsel %vm781, %v197, %v310
        %v799 = vsel %vm781, %v199, %v312
        %v802 = vsel %vm781, %v201, %v314
        %v805 = vsel %vm781, %v203, %v316
        %vm806 = vcmask 64512
        %v808 = vsel %vm806, %v784, %v414
        %v810 = vsel %vm806, %v787, %v416
        %v812 = vsel %vm806, %v790, %v418
        %v814 = vsel %vm806, %v793, %v420
        %v816 = vsel %vm806, %v796, %v422
        %v818 = vsel %vm806, %v799, %v424
        %v820 = vsel %vm806, %v802, %v426
        %v822 = vsel %vm806, %v805, %v428
        %vm823 = vcmask 97280
        %v825 = vsel %vm823, %v808, %v454
        %v827 = vsel %vm823, %v810, %v456
        %v829 = vsel %vm823, %v812, %v458
        %v831 = vsel %vm823, %v814, %v460
        %v833 = vsel %vm823, %v816, %v462
        %v835 = vsel %vm823, %v818, %v464
        %v837 = vsel %vm823, %v820, %v466
        %v839 = vsel %vm823, %v822, %v468
        %vm840 = vcmask 130048
        %v842 = vsel %vm840, %v825, %v494
        %v844 = vsel %vm840, %v827, %v496
        %v846 = vsel %vm840, %v829, %v498
        %v848 = vsel %vm840, %v831, %v500
        %v850 = vsel %vm840, %v833, %v502
        %v852 = vsel %vm840, %v835, %v504
        %v854 = vsel %vm840, %v837, %v506
        %v856 = vsel %vm840, %v839, %v508
        %vm857 = vcmask 162816
        %v859 = vsel %vm857, %v842, %v590
        %v861 = vsel %vm857, %v844, %v592
        %v863 = vsel %vm857, %v846, %v594
        %v865 = vsel %vm857, %v848, %v596
        %v867 = vsel %vm857, %v850, %v598
        %v869 = vsel %vm857, %v852, %v600
        %v871 = vsel %vm857, %v854, %v602
        %v873 = vsel %vm857, %v856, %v604
        %vm874 = vcmask 195584
        %v876 = vsel %vm874, %v859, %v630
        %v878 = vsel %vm874, %v861, %v632
        %v880 = vsel %vm874, %v863, %v634
        %v882 = vsel %vm874, %v865, %v636
        %v884 = vsel %vm874, %v867, %v638
        %v886 = vsel %vm874, %v869, %v640
        %v888 = vsel %vm874, %v871, %v642
        %v890 = vsel %vm874, %v873, %v644
        %vm891 = vcmask 228352
        %v893 = vsel %vm891, %v876, %v670
        %v895 = vsel %vm891, %v878, %v672
        %v897 = vsel %vm891, %v880, %v674
        %v899 = vsel %vm891, %v882, %v676
        %v901 = vsel %vm891, %v884, %v678
        %v903 = vsel %vm891, %v886, %v680
        %v905 = vsel %vm891, %v888, %v682
        %v907 = vsel %vm891, %v890, %v684
        %vm908 = vcmask 261120
        %v910 = vsel %vm908, %v893, %v766
        %v912 = vsel %vm908, %v895, %v768
        %v914 = vsel %vm908, %v897, %v770
        %v916 = vsel %vm908, %v899, %v772
        %v918 = vsel %vm908, %v901, %v774
        %v920 = vsel %vm908, %v903, %v776
        %v922 = vsel %vm908, %v905, %v778
        %v924 = vsel %vm908, %v907, %v780
        %v925 = vld [vmem:[%s1] sm:$0xf]
        %v926 = vld [vmem:[%s1 + $0x4] sm:$0xf]
        %v927 = vld [vmem:[%s1 + $0x8] sm:$0xf]
        %v928 = vld [vmem:[%s1 + $0xc] sm:$0xf]
        %v929 = vld [vmem:[%s1 + $0x10] sm:$0x3]
        %v930 = vld [vmem:[%s2] sm:$0x1]
        %v932 = vlaneseq
        %v933 = vshrl.u32 %v932, 7
        %v934 = vsub.s32 0, %v933
        %v935 = vrot.slane %v930, %v934
        %v945 = vunpack.c.l.b16 %v910
        %v946 = vunpack.c.l.b16 %v912
        %v947 = vunpack.c.l.b16 %v914
        %v948 = vunpack.c.l.b16 %v916
        %v949 = vunpack.c.l.b16 %v918
        %v950 = vunpack.c.l.b16 %v920
        %v951 = vunpack.c.l.b16 %v922
        %v952 = vunpack.c.l.b16 %v924
        %v953 = vpack.c.b16 %v946, %v945
        %v954 = vpack.c.b16 %v948, %v947
        %v955 = vpack.c.b16 %v950, %v949
        %v956 = vpack.c.b16 %v952, %v951
        %v962 = vunpack.c.l.b16 %v925
        %v963 = vunpack.c.l.b16 %v926
        %v964 = vunpack.c.l.b16 %v927
        %v965 = vunpack.c.l.b16 %v928
        %v966 = vunpack.c.l.b16 %v929
        %v967 = vpack.c.b16 %v963, %v962
        %v968 = vpack.c.b16 %v965, %v964
        %v969 = vpack.c.b16 %v966, %v966
        %vm972 = vcmask 293888
        %v974 = vsel %vm972, %v953, 0
        %v977 = vsel %vm972, %v954, 0
        %v980 = vsel %vm972, %v955, 0
        %v983 = vsel %vm972, %v956, 0
        %vm985 = vcmask 1041408
        %v987 = vsel %vm985, %v969, 0
        %989 = vmatprep.subr.bf16.mxu0 0
        %990 = vmatpush1.bf16.msra.mxu0 0
        %991 = vmatprep.subr.bf16.mxu0 0
        %992 = vmatpush1.bf16.msra.mxu0 0
        %993 = vmatprep.subr.bf16.mxu0 0
        %994 = vmatpush1.bf16.msra.mxu0 0
        %995 = vmatprep.subr.bf16.mxu0 0
        %996 = vmatpush1.bf16.msra.mxu0 0
        %997 = vmatprep.subr.bf16.mxu0 0
        %998 = vmatpush1.bf16.msra.mxu0 0
        %999 = vmatprep.subr.bf16.mxu0 0
        %1000 = vmatpush1.bf16.msra.mxu0 %v987
        %1001 = vmatprep.subr.bf16.mxu0 0
        %1002 = vmatpush1.bf16.msra.mxu0 %v968
        %1003 = vmatprep.subr.bf16.mxu0 0
        %1004 = vmatpush1.bf16.msra.mxu0 %v967
        %1005 = vmatprep.subr.bf16.mxu0 0
        %1006 = vmatpush2.bf16.msra.mxu0 0
        %1007 = vmatprep.subr.bf16.mxu0 0
        %1008 = vmatpush2.bf16.msra.mxu0 0
        %1009 = vmatprep.subr.bf16.mxu0 0
        %1010 = vmatpush2.bf16.msra.mxu0 0
        %1011 = vmatprep.subr.bf16.mxu0 0
        %1012 = vmatpush2.bf16.msra.mxu0 0
        %1013 = vmatprep.subr.bf16.mxu0 0
        %1014 = vmatpush2.bf16.msra.mxu0 0
        %1015 = vmatprep.subr.bf16.mxu0 0
        %1016 = vmatpush2.bf16.msra.mxu0 0
        %1017 = vmatprep.subr.bf16.mxu0 0
        %1018 = vmatpush2.bf16.msra.mxu0 0
        %1019 = vmatprep.subr.bf16.mxu0 0
        %1020 = vmatpush2.bf16.msra.mxu0 0
        %1021 = vmatprep.mubr.bf16.mxu0 0
        %1022 = vmatmul.mubr.bf16.gmra.mxu0 %v974
        %v1023 = vpop.f32.mrf.mxu0
        %v1024 = vadd.f32 %v935, %v1023
        %v1025 = vpop.f32.mrf.mxu0
        %v1026 = vpop.f32.mrf.mxu0
        %v1027 = vadd.f32 %v935, %v1026
        %v1028 = vpop.f32.mrf.mxu0
        %1029 = vmatprep.mubr.bf16.mxu0 0
        %1030 = vmatmul.mubr.bf16.gmra.mxu0 %v977
        %v1031 = vpop.f32.mrf.mxu0
        %v1032 = vadd.f32 %v935, %v1031
        %v1033 = vpop.f32.mrf.mxu0
        %v1034 = vpop.f32.mrf.mxu0
        %v1035 = vadd.f32 %v935, %v1034
        %v1036 = vpop.f32.mrf.mxu0
        %1037 = vmatprep.mubr.bf16.mxu0 0
        %1038 = vmatmul.mubr.bf16.gmra.mxu0 %v980
        %v1039 = vpop.f32.mrf.mxu0
        %v1040 = vadd.f32 %v935, %v1039
        %v1041 = vpop.f32.mrf.mxu0
        %v1042 = vpop.f32.mrf.mxu0
        %v1043 = vadd.f32 %v935, %v1042
        %v1044 = vpop.f32.mrf.mxu0
        %1045 = vmatprep.mubr.bf16.mxu0 0
        %1046 = vmatmul.mubr.bf16.gmra.mxu0 %v983
        %v1047 = vpop.f32.mrf.mxu0
        %v1048 = vadd.f32 %v935, %v1047
        %v1049 = vpop.f32.mrf.mxu0
        %v1050 = vpop.f32.mrf.mxu0
        %v1051 = vadd.f32 %v935, %v1050
        %v1052 = vpop.f32.mrf.mxu0
        %1053 = vdwg.mxu0
        %1054 = vst [vmem:[%s177] sm:$0xff] %v1024
        %1055 = vst [vmem:[%s177 + $0x8] sm:$0xff] %v1027
        %1056 = vst [vmem:[%s177 + $0x10] sm:$0xff] %v1032
        %1057 = vst [vmem:[%s177 + $0x18] sm:$0xff] %v1035
        %1058 = vst [vmem:[%s177 + $0x20] sm:$0xff] %v1040
        %1059 = vst [vmem:[%s177 + $0x28] sm:$0xff] %v1043
        %1060 = vst [vmem:[%s177 + $0x30] sm:$0xff] %v1048
        %1061 = vst [vmem:[%s177 + $0x38] sm:$0xff] %v1051
        %s1062 = sand.u32 %s107, 1
        %s1063 = scalar_lea.sflag [#allocation3], %s1062
        %s1064 = sand.u32 %s107, 1
        %s1065 = smul.addr %s1064, 64
        %s1066 = scalar_lea.vmem [#allocation2], %s1065
        // Predicated region
        $region33: #{tpu_custom_call.1} parent=31 // pred_check
          %p1067 = pneg %p117
        $region34: #{tpu_custom_call.1} parent=31 // pred_check_branch
          %1069 = sbr.rel (%p1067) target = $region36
        $region35: #{tpu_custom_call.1} parent=31 // pred_region
          %s1070 = smul.u32 8, %s22
          %s1072 = ssub.s32 1024, 1024
          %1073 = vsyncadd %s1063, %s1072
          %s1074 = smul.addr %s21, 8
          %s1075 = sadd.s32 %s1070, %s1074
          %s1076 = smul.addr %s1075, 128
          %s1077 = scalar_lea.hbm %s3, %s1076
          %s1078 = sshll.u32 %s1066, 4
          %s1079 = int_to_ptr.vmem [resolvable:$true] %s1078
          %1084 = dma.vmem_to_hbm [thread:$0]  %s1079, 1024, %s1077, %s1063, 128, 128, 8
        $region36: #{tpu_custom_call.1} parent=31 // pred_fallthru
          _
      $region32: #{tpu_custom_call.1} parent=5 // pred_fallthru
        _
      %p1085 = scmp.le.s32.totalorder 2, %s12
      // Predicated region
      $region37: #{tpu_custom_call.1} parent=5 // pred_check
        %p1086 = pneg %p1085
      $region38: #{tpu_custom_call.1} parent=5 // pred_check_branch
        %1088 = sbr.rel (%p1086) target = $region40
      $region39: #{tpu_custom_call.1} parent=5 // pred_region
        %s1089 = ssub.s32 %s12, 2
        // Predicated region
        $region41: #{tpu_custom_call.1} parent=39 // pred_check
          %p1090 = pneg %p123
        $region42: #{tpu_custom_call.1} parent=39 // pred_check_branch
          %1092 = sbr.rel (%p1090) target = $region44
        $region43: #{tpu_custom_call.1} parent=39 // pred_region
          %s1093 = sand.u32 %s108, 1
          %s1094 = scalar_lea.sflag [#allocation3], %s1093
          %s1095 = sand.u32 %s108, 1
          %s1096 = smul.addr %s1095, 64
          %s1097 = scalar_lea.vmem [#allocation2], %s1096
          %1098 = dma.done %s1094, 1024
        $region44: #{tpu_custom_call.1} parent=39 // pred_fallthru
          _
      $region40: #{tpu_custom_call.1} parent=5 // pred_fallthru
        _
    $region6: #{tpu_custom_call.1} parent=1 // loop_footer
      %s16 = sadd.s32 1, %s12
    $region7: #{tpu_custom_call.1} parent=1 // loop_footer_branch
      %11 = sbr.rel target = $region3
    $region8: #{tpu_custom_call.1} parent=1 // loop_exit
      _
    %1099 = vsyncpa [#allocation3], 1
    %s1100 = scalar_lea.sflag [#allocation3], 1
    %1101 = vsyncpa %s1100, 1

</llo_original>
